<compile_context>
chip_gen: v7x
topology: tpu7x:2x2x1
jax: 0.10.0
libtpu: 0.0.40
codegen_flags: <defaults>
</compile_context>

<pallas_src>
import functools
import math

import jax
import jax.numpy as jnp
from jax.experimental import pallas as pl
from jax.experimental.pallas import tpu as pltpu


def _gelu_exact(x):
    # torch.nn.GELU() default: exact erf-based GELU (computed in f32).
    return 0.5 * x * (1.0 + jax.lax.erf(x * (1.0 / math.sqrt(2.0))))


def _ffn_kernel(x_ref, w1_ref, b1_ref, w2_ref, b2_ref, o_ref):
    # x_ref : (tm, D_in_p)       VMEM, native dtype (f32 or bf16)
    # w1_ref: (D_in_p, H_p)      VMEM (full, constant index -> fetched once)
    # b1_ref: (1, H_p)           VMEM
    # w2_ref: (H_p, D_out_p)     VMEM
    # b2_ref: (1, D_out_p)       VMEM
    # o_ref : (tm, D_out_p)      VMEM, lane-dense (D_out_p % 128 == 0)

    # First matmul: native-dtype operands on the MXU, f32 accumulation.
    h = jnp.dot(x_ref[...], w1_ref[...], preferred_element_type=jnp.float32)
    # Bias + GELU in f32 (safe on v5e, no hidden bf16 promotion stalls).
    h = h + b1_ref[...].astype(jnp.float32)
    h = _gelu_exact(h)

    # Cast the activation back to the weight dtype so the second matmul also
    # runs at full (bf16) MXU rate when the params are bf16.
    p = h.astype(w2_ref.dtype)
    y = jnp.dot(p, w2_ref[...], preferred_element_type=jnp.float32)
    y = y + b2_ref[...].astype(jnp.float32)
    o_ref[...] = y.astype(o_ref.dtype)


def _round_up(x, m):
    return (x + m - 1) // m * m


@functools.partial(jax.jit, static_argnames=("tm",))
def position_wise_ffn(x, w1, b1, w2, b2, *, tm=512):
    """x: (..., D_in) -> (..., D_out), computed with a Pallas TPU kernel.

    Weights are stored transposed relative to torch.nn.Linear:
    w1: (D_in, H), w2: (H, D_out).
    """
    orig_shape = x.shape
    d_in = orig_shape[-1]
    h_dim = w1.shape[1]
    d_out = w2.shape[1]

    x2 = x.reshape(-1, d_in)
    m = x2.shape[0]

    # Lane-dense / MXU-friendly padding: feature dims -> multiples of 128,
    # rows -> multiple of the (8-aligned) row tile.  Zero padding is exact:
    # zero input columns hit zero W1 rows, padded hidden units give
    # gelu(0) = 0 against zero W2 rows, and padded output columns are sliced.
    d_in_p = _round_up(d_in, 128)
    h_p = _round_up(h_dim, 128)
    d_out_p = _round_up(d_out, 128)
    tm_eff = min(tm, _round_up(m, 8))     # shrink tile for tiny inputs
    m_p = _round_up(m, tm_eff)

    x2p = jnp.pad(x2, ((0, m_p - m), (0, d_in_p - d_in)))
    w1p = jnp.pad(w1, ((0, d_in_p - d_in), (0, h_p - h_dim)))
    b1p = jnp.pad(b1, (0, h_p - h_dim)).reshape(1, h_p)
    w2p = jnp.pad(w2, ((0, h_p - h_dim), (0, d_out_p - d_out)))
    b2p = jnp.pad(b2, (0, d_out_p - d_out)).reshape(1, d_out_p)

    itemsize = x2p.dtype.itemsize
    w_itemsize = w1p.dtype.itemsize
    cost = pl.CostEstimate(
        flops=2 * m_p * (d_in_p * h_p + h_p * d_out_p),
        transcendentals=m_p * h_p,  # one erf per hidden activation
        bytes_accessed=(itemsize * m_p * (d_in_p + d_out_p)
                        + w_itemsize * (d_in_p * h_p + h_p * d_out_p
                                        + h_p + d_out_p)),
    )

    out = pl.pallas_call(
        _ffn_kernel,
        out_shape=jax.ShapeDtypeStruct((m_p, d_out_p), x.dtype),
        grid_spec=pltpu.PrefetchScalarGridSpec(
            num_scalar_prefetch=0,
            grid=(m_p // tm_eff,),
            in_specs=[
                pl.BlockSpec((tm_eff, d_in_p), lambda i: (i, 0)),
                # Weights/biases: constant block index -> DMA'd once, reused
                # across all row tiles.
                pl.BlockSpec((d_in_p, h_p), lambda i: (0, 0)),
                pl.BlockSpec((1, h_p), lambda i: (0, 0)),
                pl.BlockSpec((h_p, d_out_p), lambda i: (0, 0)),
                pl.BlockSpec((1, d_out_p), lambda i: (0, 0)),
            ],
            out_specs=pl.BlockSpec((tm_eff, d_out_p), lambda i: (i, 0)),
        ),
        compiler_params=pltpu.CompilerParams(
            dimension_semantics=("parallel",),   # shards across TCs on v7x
            vmem_limit_bytes=64 * 1024 * 1024,
        ),
        cost_estimate=cost,
    )(x2p, w1p, b1p, w2p, b2p)

    out = out[:m, :d_out]
    return out.reshape(*orig_shape[:-1], d_out)


def _init_linear(key, fan_in, fan_out, dtype=jnp.float32):
    # Mirror torch.nn.Linear default init: U(-1/sqrt(fan_in), 1/sqrt(fan_in)).
    kw, kb = jax.random.split(key)
    bound = 1.0 / math.sqrt(fan_in)
    # Stored already transposed: (fan_in, fan_out).
    w = jax.random.uniform(kw, (fan_in, fan_out), dtype, -bound, bound)
    b = jax.random.uniform(kb, (fan_out,), dtype, -bound, bound)
    return w, b


if __name__ == "__main__":
    # Module config: ffn_num_input=16, ffn_num_hiddens=32, ffn_num_outputs=16,
    # dropout=0.0, expansion_rate=2  ->  hidden dim = 64.
    ffn_num_input = 16
    ffn_num_hiddens = 32
    ffn_num_outputs = 16
    expansion_rate = 2
    hidden = ffn_num_hiddens * expansion_rate

    batch, seq = 2, 8

    key = jax.random.PRNGKey(0)
    kx, k1, k2 = jax.random.split(key, 3)

    x = jax.random.normal(kx, (batch, seq, ffn_num_input), jnp.float32)
    w1, b1 = _init_linear(k1, ffn_num_input, hidden)
    w2, b2 = _init_linear(k2, hidden, ffn_num_outputs)

    # f32 path (matches the torch module exactly up to float error).
    out = position_wise_ffn(x, w1, b1, w2, b2, tm=512)
    out = jax.block_until_ready(out)

    # Pure-JAX reference of the same forward pass.
    pre = x @ w1 + b1
    ref = 0.5 * pre * (1.0 + jax.lax.erf(pre / math.sqrt(2.0)))
    ref = ref @ w2 + b2
    assert out.shape == (batch, seq, ffn_num_outputs)
    assert jnp.max(jnp.abs(out - ref)) < 1e-4

    # bf16 path (exercises the native-dtype MXU operands; loose tolerance).
    out_bf16 = position_wise_ffn(
        x.astype(jnp.bfloat16),
        w1.astype(jnp.bfloat16), b1.astype(jnp.bfloat16),
        w2.astype(jnp.bfloat16), b2.astype(jnp.bfloat16), tm=512)
    out_bf16 = jax.block_until_ready(out_bf16)
    assert jnp.max(jnp.abs(out_bf16.astype(jnp.float32) - ref)) < 1e-1

    print("KERNEL_OK")
</pallas_src>

<mosaic_0001>
module attributes {stable_mosaic.version = 11 : i64} {
  func.func @_ffn_kernel(%arg0: i32, %arg1: memref<16x128xf32, #tpu.memory_space<vmem>>, %arg2: memref<128x128xf32, #tpu.memory_space<vmem>>, %arg3: memref<1x128xf32, #tpu.memory_space<vmem>>, %arg4: memref<128x128xf32, #tpu.memory_space<vmem>>, %arg5: memref<1x128xf32, #tpu.memory_space<vmem>>, %arg6: memref<16x128xf32, #tpu.memory_space<vmem>>) attributes {dimension_semantics = [#tpu.dimension_semantics<parallel>], iteration_bounds = array<i64: 1>, scalar_prefetch = 0 : i64, scratch_operands = 0 : i64, tpu.core_type = #tpu.core_type<tc>, window_params = [{transform_indices = @transform_0, window_bounds = array<i64: 16, 128>}, {pipeline_mode = #tpu.pipeline_mode<synchronous>, transform_indices = @transform_1, window_bounds = array<i64: 128, 128>}, {pipeline_mode = #tpu.pipeline_mode<synchronous>, transform_indices = @transform_2, window_bounds = array<i64: 1, 128>}, {pipeline_mode = #tpu.pipeline_mode<synchronous>, transform_indices = @transform_3, window_bounds = array<i64: 128, 128>}, {pipeline_mode = #tpu.pipeline_mode<synchronous>, transform_indices = @transform_4, window_bounds = array<i64: 1, 128>}, {transform_indices = @transform_5, window_bounds = array<i64: 16, 128>}]} {
    %c0 = arith.constant 0 : index
    %c0_0 = arith.constant 0 : index
    %0 = vector.load %arg1[%c0, %c0_0] : memref<16x128xf32, #tpu.memory_space<vmem>>, vector<16x128xf32>
    %c0_1 = arith.constant 0 : index
    %c0_2 = arith.constant 0 : index
    %1 = vector.load %arg2[%c0_1, %c0_2] : memref<128x128xf32, #tpu.memory_space<vmem>>, vector<128x128xf32>
    %cst = arith.constant dense<0.000000e+00> : vector<16x128xf32>
    %2 = tpu.matmul %0, %1, %cst {dimension_numbers = #tpu.dot_dimension_numbers<[1], [0], [0], [1], [0, 0, 1, 1], [], []>} : vector<16x128xf32>, vector<128x128xf32>, vector<16x128xf32> -> vector<16x128xf32>
    %c0_3 = arith.constant 0 : index
    %c0_4 = arith.constant 0 : index
    %3 = vector.load %arg3[%c0_3, %c0_4] : memref<1x128xf32, #tpu.memory_space<vmem>>, vector<1x128xf32>
    %4 = vector.broadcast %3 : vector<1x128xf32> to vector<16x128xf32>
    %5 = arith.addf %2, %4 : vector<16x128xf32>
    %cst_5 = arith.constant 5.000000e-01 : f32
    %6 = vector.broadcast %cst_5 : f32 to vector<16x128xf32>
    %7 = arith.mulf %6, %5 : vector<16x128xf32>
    %cst_6 = arith.constant 0.707106769 : f32
    %8 = vector.broadcast %cst_6 : f32 to vector<16x128xf32>
    %9 = arith.mulf %5, %8 : vector<16x128xf32>
    %10 = math.erf %9 : vector<16x128xf32>
    %cst_7 = arith.constant 1.000000e+00 : f32
    %11 = vector.broadcast %cst_7 : f32 to vector<16x128xf32>
    %12 = arith.addf %11, %10 : vector<16x128xf32>
    %13 = arith.mulf %7, %12 : vector<16x128xf32>
    %c0_8 = arith.constant 0 : index
    %c0_9 = arith.constant 0 : index
    %14 = vector.load %arg4[%c0_8, %c0_9] : memref<128x128xf32, #tpu.memory_space<vmem>>, vector<128x128xf32>
    %cst_10 = arith.constant dense<0.000000e+00> : vector<16x128xf32>
    %15 = tpu.matmul %13, %14, %cst_10 {dimension_numbers = #tpu.dot_dimension_numbers<[1], [0], [0], [1], [0, 0, 1, 1], [], []>} : vector<16x128xf32>, vector<128x128xf32>, vector<16x128xf32> -> vector<16x128xf32>
    %c0_11 = arith.constant 0 : index
    %c0_12 = arith.constant 0 : index
    %16 = vector.load %arg5[%c0_11, %c0_12] : memref<1x128xf32, #tpu.memory_space<vmem>>, vector<1x128xf32>
    %17 = vector.broadcast %16 : vector<1x128xf32> to vector<16x128xf32>
    %18 = arith.addf %15, %17 : vector<16x128xf32>
    %c0_13 = arith.constant 0 : index
    %c0_14 = arith.constant 0 : index
    %19 = vector.load %arg6[%c0_13, %c0_14] : memref<16x128xf32, #tpu.memory_space<vmem>>, vector<16x128xf32>
    tpu.vector_store %arg6[%c0_13, %c0_14], %18 {strides = array<i32>} : memref<16x128xf32, #tpu.memory_space<vmem>>, vector<16x128xf32>,
    return
  }
  func.func @transform_0(%arg0: i32) -> (i32, i32) {
    %c0_i32 = arith.constant 0 : i32
    %c0_i32_0 = arith.constant 0 : i32
    return %arg0, %c0_i32 : i32, i32
  }
  func.func @transform_1(%arg0: i32) -> (i32, i32) {
    %c0_i32 = arith.constant 0 : i32
    %c0_i32_0 = arith.constant 0 : i32
    %c0_i32_1 = arith.constant 0 : i32
    return %c0_i32, %c0_i32_0 : i32, i32
  }
  func.func @transform_2(%arg0: i32) -> (i32, i32) {
    %c0_i32 = arith.constant 0 : i32
    %c0_i32_0 = arith.constant 0 : i32
    %c0_i32_1 = arith.constant 0 : i32
    return %c0_i32, %c0_i32_0 : i32, i32
  }
  func.func @transform_3(%arg0: i32) -> (i32, i32) {
    %c0_i32 = arith.constant 0 : i32
    %c0_i32_0 = arith.constant 0 : i32
    %c0_i32_1 = arith.constant 0 : i32
    return %c0_i32, %c0_i32_0 : i32, i32
  }
  func.func @transform_4(%arg0: i32) -> (i32, i32) {
    %c0_i32 = arith.constant 0 : i32
    %c0_i32_0 = arith.constant 0 : i32
    %c0_i32_1 = arith.constant 0 : i32
    return %c0_i32, %c0_i32_0 : i32, i32
  }
  func.func @transform_5(%arg0: i32) -> (i32, i32) {
    %c0_i32 = arith.constant 0 : i32
    %c0_i32_0 = arith.constant 0 : i32
    return %arg0, %c0_i32 : i32, i32
  }
}

</mosaic_0001>

<llo_original>
// kernel: position_wise_ffn.1
$region0: #{position_wise_ffn.1}
  #allocation0 [shape = 'u32[]', space=smem, size = 0x4, offset = 0x4, fixed_abs, tag = 'smem constant byte address 0x4 - core index']
  #allocation1 [shape = 'u32[144,128]{1,0:T(1,128)}', space=vmem, size = 0x12000, scoped, tag = 'internal scratch']
  %s0 = inlined_call_operand.hbm [shape: f32[16,128], index: 0, kind: input, shape index: {}]
  %s1 = inlined_call_operand.hbm [shape: f32[128,128], index: 1, kind: input, shape index: {}]
  %s2 = inlined_call_operand.hbm [shape: f32[1,128], index: 2, kind: input, shape index: {}]
  %s3 = inlined_call_operand.hbm [shape: f32[128,128], index: 3, kind: input, shape index: {}]
  %s4 = inlined_call_operand.hbm [shape: f32[1,128], index: 4, kind: input, shape index: {}]
  %s5 = inlined_call_operand.hbm [shape: f32[16,128], index: 5, kind: output, shape index: {}]
  %s6 = sld [smem:[#allocation0]]
  $region50: #{position_wise_ffn.1} parent=0
    _
  %s8 = ssub.s32 1, %s6
  %s9 = scalar_select 0, %s8, %s6
  $region1: #{position_wise_ffn.1} parent=0
    #allocation2 [shape = 'u8[8192]{0}', space=vmem, size = 0x2000, scoped, tag = 'input window, operand 0, single buffered']
    #allocation3 [shape = 's32[1]{0}', space=sflag, size = 0x4, scoped, tag = 'scoped memory for position_wise_ffn.1']
    #allocation4 [shape = 's32[1]{0}', space=sflag, size = 0x4, scoped, tag = 'scoped memory for position_wise_ffn.1']
    #allocation5 [shape = 'u8[65536]{0}', space=vmem, size = 0x10000, scoped, tag = 'input window, operand 1, single buffered']
    #allocation6 [shape = 's32[1]{0}', space=sflag, size = 0x4, scoped, tag = 'scoped memory for position_wise_ffn.1']
    #allocation7 [shape = 'u8[512]{0}', space=vmem, size = 0x400, scoped, tag = 'input window, operand 2, single buffered']
    #allocation8 [shape = 'u8[65536]{0}', space=vmem, size = 0x10000, scoped, tag = 'input window, operand 3, single buffered']
    #allocation9 [shape = 's32[1]{0}', space=sflag, size = 0x4, scoped, tag = 'scoped memory for position_wise_ffn.1']
    #allocation10 [shape = 'u8[512]{0}', space=vmem, size = 0x400, scoped, tag = 'input window, operand 4, single buffered']
    #allocation11 [shape = 'u8[8192]{0}', space=vmem, size = 0x2000, scoped, tag = 'output window, operand 0, single buffered']
    %10 = vsyncpa [#allocation3], 0
    %11 = vsyncpa [#allocation6], 0
    %12 = vsyncpa [#allocation9], 0
    %13 = vsyncpa [#allocation4], 0
    // Predicated region
    $region2: #{position_wise_ffn.1} parent=1 // pred_check
      _
    $region3: #{position_wise_ffn.1} parent=1 // pred_check_branch
      %15 = sbr.rel (0) target = $region5
    $region4: #{position_wise_ffn.1} parent=1 // pred_region
      %s17 = ssub.s32 256, 256
      %18 = vsyncadd [#allocation3], %s17
      %s19 = sshll.u32 [#allocation2], 4
      %s20 = int_to_ptr.vmem [resolvable:$true] %s19
      %25 = dma.hbm_to_vmem [thread:$0]  %s0, 256, %s20, [#allocation3], 128, 128, 8
    $region5: #{position_wise_ffn.1} parent=1 // pred_fallthru
      _
    // Predicated region
    $region6: #{position_wise_ffn.1} parent=1 // pred_check
      _
    $region7: #{position_wise_ffn.1} parent=1 // pred_check_branch
      %27 = sbr.rel (0) target = $region9
    $region8: #{position_wise_ffn.1} parent=1 // pred_region
      %s29 = ssub.s32 2048, 2048
      %30 = vsyncadd [#allocation6], %s29
      %s31 = sshll.u32 [#allocation5], 4
      %s32 = int_to_ptr.vmem [resolvable:$true] %s31
      %37 = dma.hbm_to_vmem [thread:$0]  %s1, 2048, %s32, [#allocation6], 128, 128, 8
    $region9: #{position_wise_ffn.1} parent=1 // pred_fallthru
      _
    // Predicated region
    $region10: #{position_wise_ffn.1} parent=1 // pred_check
      _
    $region11: #{position_wise_ffn.1} parent=1 // pred_check_branch
      %39 = sbr.rel (0) target = $region13
    $region12: #{position_wise_ffn.1} parent=1 // pred_region
      %s41 = ssub.s32 16, 16
      %42 = vsyncadd [#allocation6], %s41
      %s44 = sshll.u32 [#allocation7], 4
      %s45 = int_to_ptr.vmem [resolvable:$true] %s44
      %47 = dma.hbm_to_vmem [thread:$0]  %s2, 16, %s45, [#allocation6]
    $region13: #{position_wise_ffn.1} parent=1 // pred_fallthru
      _
    // Predicated region
    $region14: #{position_wise_ffn.1} parent=1 // pred_check
      _
    $region15: #{position_wise_ffn.1} parent=1 // pred_check_branch
      %49 = sbr.rel (0) target = $region17
    $region16: #{position_wise_ffn.1} parent=1 // pred_region
      %s51 = ssub.s32 2048, 2048
      %52 = vsyncadd [#allocation9], %s51
      %s53 = sshll.u32 [#allocation8], 4
      %s54 = int_to_ptr.vmem [resolvable:$true] %s53
      %59 = dma.hbm_to_vmem [thread:$0]  %s3, 2048, %s54, [#allocation9], 128, 128, 8
    $region17: #{position_wise_ffn.1} parent=1 // pred_fallthru
      _
    // Predicated region
    $region18: #{position_wise_ffn.1} parent=1 // pred_check
      _
    $region19: #{position_wise_ffn.1} parent=1 // pred_check_branch
      %61 = sbr.rel (0) target = $region21
    $region20: #{position_wise_ffn.1} parent=1 // pred_region
      %s63 = ssub.s32 16, 16
      %64 = vsyncadd [#allocation9], %s63
      %s66 = sshll.u32 [#allocation10], 4
      %s67 = int_to_ptr.vmem [resolvable:$true] %s66
      %69 = dma.hbm_to_vmem [thread:$0]  %s4, 16, %s67, [#allocation9]
    $region21: #{position_wise_ffn.1} parent=1 // pred_fallthru
      _
    // Predicated region
    $region22: #{position_wise_ffn.1} parent=1 // pred_check
      _
    $region23: #{position_wise_ffn.1} parent=1 // pred_check_branch
      %71 = sbr.rel (0) target = $region25
    $region24: #{position_wise_ffn.1} parent=1 // pred_region
      %72 = dma.done [#allocation3], 256
    $region25: #{position_wise_ffn.1} parent=1 // pred_fallthru
      _
    // Predicated region
    $region26: #{position_wise_ffn.1} parent=1 // pred_check
      _
    $region27: #{position_wise_ffn.1} parent=1 // pred_check_branch
      %74 = sbr.rel (0) target = $region29
    $region28: #{position_wise_ffn.1} parent=1 // pred_region
      %75 = dma.done [#allocation6], 2048
    $region29: #{position_wise_ffn.1} parent=1 // pred_fallthru
      _
    // Predicated region
    $region30: #{position_wise_ffn.1} parent=1 // pred_check
      _
    $region31: #{position_wise_ffn.1} parent=1 // pred_check_branch
      %77 = sbr.rel (0) target = $region33
    $region32: #{position_wise_ffn.1} parent=1 // pred_region
      %78 = dma.done [#allocation6], 16
    $region33: #{position_wise_ffn.1} parent=1 // pred_fallthru
      _
    // Predicated region
    $region34: #{position_wise_ffn.1} parent=1 // pred_check
      _
    $region35: #{position_wise_ffn.1} parent=1 // pred_check_branch
      %80 = sbr.rel (0) target = $region37
    $region36: #{position_wise_ffn.1} parent=1 // pred_region
      %81 = dma.done [#allocation9], 2048
    $region37: #{position_wise_ffn.1} parent=1 // pred_fallthru
      _
    // Predicated region
    $region38: #{position_wise_ffn.1} parent=1 // pred_check
      _
    $region39: #{position_wise_ffn.1} parent=1 // pred_check_branch
      %83 = sbr.rel (0) target = $region41
    $region40: #{position_wise_ffn.1} parent=1 // pred_region
      %84 = dma.done [#allocation9], 16
    $region41: #{position_wise_ffn.1} parent=1 // pred_fallthru
      _
    %v85 = vld [vmem:[#allocation2] sm:$0xff]
    %v86 = vld [vmem:[#allocation2 + $0x8] sm:$0xff]
    %v87 = vld [vmem:[#allocation5] sm:$0xff]
    %v88 = vld [vmem:[#allocation5 + $0x8] sm:$0xff]
    %v89 = vld [vmem:[#allocation5 + $0x10] sm:$0xff]
    %v90 = vld [vmem:[#allocation5 + $0x18] sm:$0xff]
    %v91 = vld [vmem:[#allocation5 + $0x20] sm:$0xff]
    %v92 = vld [vmem:[#allocation5 + $0x28] sm:$0xff]
    %v93 = vld [vmem:[#allocation5 + $0x30] sm:$0xff]
    %v94 = vld [vmem:[#allocation5 + $0x38] sm:$0xff]
    %v95 = vld [vmem:[#allocation5 + $0x40] sm:$0xff]
    %v96 = vld [vmem:[#allocation5 + $0x48] sm:$0xff]
    %v97 = vld [vmem:[#allocation5 + $0x50] sm:$0xff]
    %v98 = vld [vmem:[#allocation5 + $0x58] sm:$0xff]
    %v99 = vld [vmem:[#allocation5 + $0x60] sm:$0xff]
    %v100 = vld [vmem:[#allocation5 + $0x68] sm:$0xff]
    %v101 = vld [vmem:[#allocation5 + $0x70] sm:$0xff]
    %v102 = vld [vmem:[#allocation5 + $0x78] sm:$0xff]
    %v103 = vld [vmem:[#allocation7] sm:$0x1]
    %v105 = vlaneseq
    %v106 = vshrl.u32 %v105, 7
    %v107 = vsub.s32 0, %v106
    %v108 = vrot.slane %v103, %v107
    %110 = vmatprep.subr.mxu0 0.0
    %111 = vmatpush1.msra.mxu0 %v87
    %112 = vmatprep.subr.mxu0 0.0
    %113 = vmatpush1.msra.mxu0 %v88
    %114 = vmatprep.subr.mxu0 0.0
    %115 = vmatpush1.msra.mxu0 %v89
    %116 = vmatprep.subr.mxu0 0.0
    %117 = vmatpush1.msra.mxu0 %v90
    %118 = vmatprep.subr.mxu0 0.0
    %119 = vmatpush1.msra.mxu0 %v91
    %120 = vmatprep.subr.mxu0 0.0
    %121 = vmatpush1.msra.mxu0 %v92
    %122 = vmatprep.subr.mxu0 0.0
    %123 = vmatpush1.msra.mxu0 %v93
    %124 = vmatprep.subr.mxu0 0.0
    %125 = vmatpush1.msra.mxu0 %v94
    %126 = vmatprep.subr.mxu0 0.0
    %127 = vmatpush1.msra.mxu0 %v95
    %128 = vmatprep.subr.mxu0 0.0
    %129 = vmatpush1.msra.mxu0 %v96
    %130 = vmatprep.subr.mxu0 0.0
    %131 = vmatpush1.msra.mxu0 %v97
    %132 = vmatprep.subr.mxu0 0.0
    %133 = vmatpush1.msra.mxu0 %v98
    %134 = vmatprep.subr.mxu0 0.0
    %135 = vmatpush1.msra.mxu0 %v99
    %136 = vmatprep.subr.mxu0 0.0
    %137 = vmatpush1.msra.mxu0 %v100
    %138 = vmatprep.subr.mxu0 0.0
    %139 = vmatpush1.msra.mxu0 %v101
    %140 = vmatprep.subr.mxu0 0.0
    %141 = vmatpush1.msra.mxu0 %v102
    %142 = vmatprep.subr.mxu0 0.0
    %143 = vmatpush1.msra.mxu0 0.0
    %144 = vmatprep.subr.mxu0 0.0
    %145 = vmatpush1.msra.mxu0 0.0
    %146 = vmatprep.subr.mxu0 0.0
    %147 = vmatpush1.msra.mxu0 0.0
    %148 = vmatprep.subr.mxu0 0.0
    %149 = vmatpush1.msra.mxu0 0.0
    %150 = vmatprep.subr.mxu0 0.0
    %151 = vmatpush1.msra.mxu0 0.0
    %152 = vmatprep.subr.mxu0 0.0
    %153 = vmatpush1.msra.mxu0 0.0
    %154 = vmatprep.subr.mxu0 0.0
    %155 = vmatpush1.msra.mxu0 0.0
    %156 = vmatprep.subr.mxu0 0.0
    %157 = vmatpush1.msra.mxu0 0.0
    %158 = vmatprep.subr.mxu0 0.0
    %159 = vmatpush1.msra.mxu0 0.0
    %160 = vmatprep.subr.mxu0 0.0
    %161 = vmatpush1.msra.mxu0 0.0
    %162 = vmatprep.subr.mxu0 0.0
    %163 = vmatpush1.msra.mxu0 0.0
    %164 = vmatprep.subr.mxu0 0.0
    %165 = vmatpush1.msra.mxu0 0.0
    %166 = vmatprep.subr.mxu0 0.0
    %167 = vmatpush1.msra.mxu0 0.0
    %168 = vmatprep.subr.mxu0 0.0
    %169 = vmatpush1.msra.mxu0 0.0
    %170 = vmatprep.subr.mxu0 0.0
    %171 = vmatpush1.msra.mxu0 0.0
    %172 = vmatprep.subr.mxu0 0.0
    %173 = vmatpush1.msra.mxu0 0.0
    %174 = vmatprep.mubr.f32.mxu0 0.0
    %175 = vmatmul.mubr.f32.gmra.mrb[0].mxu0 %v85
    %v176 = vpop.f32.mrb[0].mxu0
    %v177 = vadd.f32 %v108, %v176
    %v178 = vpop.f32.mrb[0].mxu0
    %179 = vmatprep.mubr.f32.mxu0 0.0
    %180 = vmatmul.mubr.f32.gmra.mrb[0].mxu0 %v86
    %v181 = vpop.f32.mrb[0].mxu0
    %v182 = vadd.f32 %v108, %v181
    %v183 = vpop.f32.mrb[0].mxu0
    %184 = vdwg.mxu0
    %v185 = vmul.f32 %v177, 0.5
    %v186 = vmul.f32 %v182, 0.5
    %v187 = vmul.f32 %v177, 0.70710677
    %v188 = vmul.f32 %v182, 0.70710677
    %v189 = verf.f32.pop %v187
    %v190 = verf.f32.pop %v188
    %v191 = vadd.f32 %v189, 1.0
    %v192 = vadd.f32 %v190, 1.0
    %v193 = vmul.f32 %v185, %v191
    %v194 = vmul.f32 %v186, %v192
    %v195 = vld [vmem:[#allocation8] sm:$0xff]
    %v196 = vld [vmem:[#allocation8 + $0x8] sm:$0xff]
    %v197 = vld [vmem:[#allocation8 + $0x10] sm:$0xff]
    %v198 = vld [vmem:[#allocation8 + $0x18] sm:$0xff]
    %v199 = vld [vmem:[#allocation8 + $0x20] sm:$0xff]
    %v200 = vld [vmem:[#allocation8 + $0x28] sm:$0xff]
    %v201 = vld [vmem:[#allocation8 + $0x30] sm:$0xff]
    %v202 = vld [vmem:[#allocation8 + $0x38] sm:$0xff]
    %v203 = vld [vmem:[#allocation8 + $0x40] sm:$0xff]
    %v204 = vld [vmem:[#allocation8 + $0x48] sm:$0xff]
    %v205 = vld [vmem:[#allocation8 + $0x50] sm:$0xff]
    %v206 = vld [vmem:[#allocation8 + $0x58] sm:$0xff]
    %v207 = vld [vmem:[#allocation8 + $0x60] sm:$0xff]
    %v208 = vld [vmem:[#allocation8 + $0x68] sm:$0xff]
    %v209 = vld [vmem:[#allocation8 + $0x70] sm:$0xff]
    %v210 = vld [vmem:[#allocation8 + $0x78] sm:$0xff]
    %v211 = vld [vmem:[#allocation10] sm:$0x1]
    %v213 = vlaneseq
    %v214 = vshrl.u32 %v213, 7
    %v215 = vsub.s32 0, %v214
    %v216 = vrot.slane %v211, %v215
    %218 = vmatprep.subr.mxu0 0.0
    %219 = vmatpush1.msra.mxu0 %v195
    %220 = vmatprep.subr.mxu0 0.0
    %221 = vmatpush1.msra.mxu0 %v196
    %222 = vmatprep.subr.mxu0 0.0
    %223 = vmatpush1.msra.mxu0 %v197
    %224 = vmatprep.subr.mxu0 0.0
    %225 = vmatpush1.msra.mxu0 %v198
    %226 = vmatprep.subr.mxu0 0.0
    %227 = vmatpush1.msra.mxu0 %v199
    %228 = vmatprep.subr.mxu0 0.0
    %229 = vmatpush1.msra.mxu0 %v200
    %230 = vmatprep.subr.mxu0 0.0
    %231 = vmatpush1.msra.mxu0 %v201
    %232 = vmatprep.subr.mxu0 0.0
    %233 = vmatpush1.msra.mxu0 %v202
    %234 = vmatprep.subr.mxu0 0.0
    %235 = vmatpush1.msra.mxu0 %v203
    %236 = vmatprep.subr.mxu0 0.0
    %237 = vmatpush1.msra.mxu0 %v204
    %238 = vmatprep.subr.mxu0 0.0
    %239 = vmatpush1.msra.mxu0 %v205
    %240 = vmatprep.subr.mxu0 0.0
    %241 = vmatpush1.msra.mxu0 %v206
    %242 = vmatprep.subr.mxu0 0.0
    %243 = vmatpush1.msra.mxu0 %v207
    %244 = vmatprep.subr.mxu0 0.0
    %245 = vmatpush1.msra.mxu0 %v208
    %246 = vmatprep.subr.mxu0 0.0
    %247 = vmatpush1.msra.mxu0 %v209
    %248 = vmatprep.subr.mxu0 0.0
    %249 = vmatpush1.msra.mxu0 %v210
    %250 = vmatprep.subr.mxu0 0.0
    %251 = vmatpush1.msra.mxu0 0.0
    %252 = vmatprep.subr.mxu0 0.0
    %253 = vmatpush1.msra.mxu0 0.0
    %254 = vmatprep.subr.mxu0 0.0
    %255 = vmatpush1.msra.mxu0 0.0
    %256 = vmatprep.subr.mxu0 0.0
    %257 = vmatpush1.msra.mxu0 0.0
    %258 = vmatprep.subr.mxu0 0.0
    %259 = vmatpush1.msra.mxu0 0.0
    %260 = vmatprep.subr.mxu0 0.0
    %261 = vmatpush1.msra.mxu0 0.0
    %262 = vmatprep.subr.mxu0 0.0
    %263 = vmatpush1.msra.mxu0 0.0
    %264 = vmatprep.subr.mxu0 0.0
    %265 = vmatpush1.msra.mxu0 0.0
    %266 = vmatprep.subr.mxu0 0.0
    %267 = vmatpush1.msra.mxu0 0.0
    %268 = vmatprep.subr.mxu0 0.0
    %269 = vmatpush1.msra.mxu0 0.0
    %270 = vmatprep.subr.mxu0 0.0
    %271 = vmatpush1.msra.mxu0 0.0
    %272 = vmatprep.subr.mxu0 0.0
    %273 = vmatpush1.msra.mxu0 0.0
    %274 = vmatprep.subr.mxu0 0.0
    %275 = vmatpush1.msra.mxu0 0.0
    %276 = vmatprep.subr.mxu0 0.0
    %277 = vmatpush1.msra.mxu0 0.0
    %278 = vmatprep.subr.mxu0 0.0
    %279 = vmatpush1.msra.mxu0 0.0
    %280 = vmatprep.subr.mxu0 0.0
    %281 = vmatpush1.msra.mxu0 0.0
    %282 = vmatprep.mubr.f32.mxu0 0.0
    %283 = vmatmul.mubr.f32.gmra.mrb[0].mxu0 %v193
    %v284 = vpop.f32.mrb[0].mxu0
    %v285 = vadd.f32 %v216, %v284
    %v286 = vpop.f32.mrb[0].mxu0
    %287 = vmatprep.mubr.f32.mxu0 0.0
    %288 = vmatmul.mubr.f32.gmra.mrb[0].mxu0 %v194
    %v289 = vpop.f32.mrb[0].mxu0
    %v290 = vadd.f32 %v216, %v289
    %v291 = vpop.f32.mrb[0].mxu0
    %292 = vdwg.mxu0
    %293 = vst [vmem:[#allocation11] sm:$0xff] %v285
    %294 = vst [vmem:[#allocation11 + $0x8] sm:$0xff] %v290
    // Predicated region
    $region42: #{position_wise_ffn.1} parent=1 // pred_check
      _
    $region43: #{position_wise_ffn.1} parent=1 // pred_check_branch
      %296 = sbr.rel (0) target = $region45
    $region44: #{position_wise_ffn.1} parent=1 // pred_region
      %s298 = ssub.s32 256, 256
      %299 = vsyncadd [#allocation4], %s298
      %s300 = sshll.u32 [#allocation11], 4
      %s301 = int_to_ptr.vmem [resolvable:$true] %s300
      %306 = dma.vmem_to_hbm [thread:$0]  %s301, 256, %s5, [#allocation4], 128, 128, 8
    $region45: #{position_wise_ffn.1} parent=1 // pred_fallthru
      _
    // Predicated region
    $region46: #{position_wise_ffn.1} parent=1 // pred_check
      _
    $region47: #{position_wise_ffn.1} parent=1 // pred_check_branch
      %308 = sbr.rel (0) target = $region49
    $region48: #{position_wise_ffn.1} parent=1 // pred_region
      %309 = dma.done [#allocation4], 256
    $region49: #{position_wise_ffn.1} parent=1 // pred_fallthru
      _
    %310 = vsyncpa [#allocation3], 1
    %311 = vsyncpa [#allocation6], 1
    %312 = vsyncpa [#allocation9], 1
    %313 = vsyncpa [#allocation4], 1

</llo_original>
